<compile_context>
chip_gen: v7x
topology: tpu7x:2x2x1
jax: 0.10.0
libtpu: 0.0.40
codegen_flags: <defaults>
</compile_context>

<pallas_src>
import jax
import jax.numpy as jnp
from jax import lax
from jax.experimental import pallas as pl
from jax.experimental.pallas import tpu as pltpu


def _clip_per_sample_kernel(scale_ref,
                            img_row_ref, txt_row_ref, txt_col_ref, img_col_ref,
                            out_ref,
                            m_img, s_img, m_txt, s_txt):
    """One (row-tile i, col-tile j) step of the online-LSE CLIP loss.

    Accumulates running max/sum for both softmax directions across j; on the
    last j it emits per_sample[i] = CE_image[i] + CE_text[i] for the row tile.
    """
    j = pl.program_id(1)
    last_j = pl.num_programs(1) - 1

    @pl.when(j == 0)
    def _init():
        m_img[...] = jnp.full(m_img.shape, -jnp.inf, jnp.float32)
        s_img[...] = jnp.zeros(s_img.shape, jnp.float32)
        m_txt[...] = jnp.full(m_txt.shape, -jnp.inf, jnp.float32)
        s_txt[...] = jnp.zeros(s_txt.shape, jnp.float32)

    scale = scale_ref[0]                       # f32 logit_scale scalar from SMEM
    dn = (((1,), (1,)), ((), ()))              # A @ B.T: contract feature dim of both

    # image -> text logits tile; scale applied to the f32 MXU output (post-scale,
    # O(TQ*TK) VPU work hidden under the matmul; rows never rescaled per step).
    logits_i = scale * lax.dot_general(img_row_ref[...], txt_col_ref[...], dn,
                                       preferred_element_type=jnp.float32)   # (TQ, TK)
    m_prev = m_img[...]
    m_new = jnp.maximum(m_prev, jnp.max(logits_i, axis=-1, keepdims=True))
    s_img[...] = (jnp.exp(m_prev - m_new) * s_img[...]
                  + jnp.sum(jnp.exp(logits_i - m_new), axis=-1, keepdims=True))
    m_img[...] = m_new

    # text -> image logits tile: second MXU matmul instead of axis=0/XLU reductions.
    logits_t = scale * lax.dot_general(txt_row_ref[...], img_col_ref[...], dn,
                                       preferred_element_type=jnp.float32)   # (TQ, TK)
    m_prev = m_txt[...]
    m_new = jnp.maximum(m_prev, jnp.max(logits_t, axis=-1, keepdims=True))
    s_txt[...] = (jnp.exp(m_prev - m_new) * s_txt[...]
                  + jnp.sum(jnp.exp(logits_t - m_new), axis=-1, keepdims=True))
    m_txt[...] = m_new

    @pl.when(j == last_j)
    def _finalize():
        # diag[i] = logit_scale * <img_i, txt_i>, straight from the feature rows
        # (f32 elementwise, once per row tile).
        diag = scale * jnp.sum(img_row_ref[...].astype(jnp.float32)
                               * txt_row_ref[...].astype(jnp.float32),
                               axis=-1, keepdims=True)                        # (TQ, 1)
        lse_i = m_img[...] + jnp.log(s_img[...])
        lse_t = m_txt[...] + jnp.log(s_txt[...])
        # CE_image[i] + CE_text[i] = (lse_i - diag) + (lse_t - diag)
        out_ref[...] = (lse_i + lse_t - 2.0 * diag).astype(out_ref.dtype)


def _select_tiles(n, d, itemsize, tile_rows=None, tile_cols=None,
                  vmem_budget=28 * 1024 * 1024):
    """Decoupled row/col tiles.  TK matches the 128/256-wide MXU; TQ is grown as
    large as the VMEM budget allows (reuse of the streamed columns ~ TQ), while
    keeping >=2 row tiles so the 'parallel' axis spans both v7x TensorCores."""
    tk = tile_cols
    if tk is None:
        tk = next((t for t in (256, 128) if n % t == 0), n)

    tq = tile_rows
    if tq is None:
        max_tq = 1024 if itemsize <= 2 else 512   # bf16 vs f32 heuristic
        best = None
        for t in (1024, 512, 256, 128):
            if t > max_tq or n % t != 0:
                continue
            # double-buffered (rows + cols) input blocks + f32 logits temporaries
            need = (2 * 2 * t * d + 2 * 2 * tk * d) * itemsize + 3 * t * tk * 4
            if need > vmem_budget:
                continue
            if best is None:
                best = t
            if n // t >= 2:          # prefer >=2 row tiles for megacore balance
                best = t
                break
        tq = best if best is not None else n   # tiny / odd batch: one full tile

    assert n % tq == 0 and n % tk == 0, (n, tq, tk)
    return tq, tk


def clip_per_sample_loss(image_features, text_features, logit_scale,
                         tile_rows=None, tile_cols=None, compute_dtype=None):
    """Per-sample CE_image + CE_text vector, shape (N,)."""
    n, d = image_features.shape
    assert text_features.shape == (n, d)

    if compute_dtype is not None:
        image_features = image_features.astype(compute_dtype)
        text_features = text_features.astype(compute_dtype)
    feat_dtype = image_features.dtype
    itemsize = jnp.dtype(feat_dtype).itemsize

    tq, tk = _select_tiles(n, d, itemsize, tile_rows, tile_cols)
    scale_arr = jnp.asarray(logit_scale, jnp.float32).reshape((1,))

    # Explicit scoped-VMEM limit: v5e defaults to 16 MiB which would gate the
    # larger row tiles; 32-64 MiB is safe on all generations' physical VMEM.
    need = (2 * 2 * tq * d + 2 * 2 * tk * d) * itemsize \
        + 3 * tq * tk * 4 + 6 * tq * 4
    vmem_limit = int(min(max(need + (4 << 20), 32 << 20), 64 << 20))

    # Advisory cost model: 2 matmuls of 2*N*N*D flops, columns re-read N/TQ times.
    cost = pl.CostEstimate(
        flops=4 * n * n * d,
        transcendentals=2 * n * n,
        bytes_accessed=2 * n * d * itemsize * (1 + n // tq) + n * 4,
    )

    out = pl.pallas_call(
        _clip_per_sample_kernel,
        out_shape=jax.ShapeDtypeStruct((n, 1), jnp.float32),
        grid_spec=pltpu.PrefetchScalarGridSpec(
            num_scalar_prefetch=1,                 # logit_scale scalar -> SMEM
            grid=(n // tq, n // tk),
            in_specs=[
                # rows: resident across j (index_map constant in j -> one DMA per i)
                pl.BlockSpec((tq, d), lambda i, j, s: (i, 0)),   # image rows
                pl.BlockSpec((tq, d), lambda i, j, s: (i, 0)),   # text rows
                # columns: streamed over j (re-read N/TQ times -> TQ sets intensity)
                pl.BlockSpec((tk, d), lambda i, j, s: (j, 0)),   # text cols
                pl.BlockSpec((tk, d), lambda i, j, s: (j, 0)),   # image cols
            ],
            out_specs=pl.BlockSpec((tq, 1), lambda i, j, s: (i, 0)),
            scratch_shapes=[pltpu.VMEM((tq, 1), jnp.float32)] * 4,
        ),
        compiler_params=pltpu.CompilerParams(
            dimension_semantics=("parallel", "arbitrary"),
            vmem_limit_bytes=vmem_limit),
        cost_estimate=cost,
    )(scale_arr, image_features, text_features, text_features, image_features)
    return out.reshape(n)


def clip_loss(image_features, text_features, logit_scale, compute_dtype=None):
    """Full ClipLoss.forward (world_size=1, truncated_loss=True)."""
    per_sample = clip_per_sample_loss(image_features, text_features, logit_scale,
                                      compute_dtype=compute_dtype)   # (N,)
    n = per_sample.shape[0]
    upper = int(n * 0.95)
    drop = n - upper
    if drop > 0:
        # Equivalent to sort-ascending / keep first `upper` / mean: drop the
        # largest `drop` values via top_k (O(N*k)) instead of a full sort.
        top_vals, _ = lax.top_k(per_sample, drop)
        loss = (jnp.sum(per_sample) - jnp.sum(top_vals)) / upper
    else:
        loss = jnp.mean(per_sample)
    return loss / 2.0
    # TODO(synk): forward-only; training use would need a custom_vjp with a
    # matching backward kernel (including the truncation mask).


def _reference_loss(image_features, text_features, logit_scale):
    # Pure-JAX reference mirroring the PyTorch module (world_size=1 path).
    logits_i = logit_scale * image_features @ text_features.T
    logits_t = logit_scale * text_features @ image_features.T
    n = logits_i.shape[0]
    labels = jnp.arange(n)
    lsm_i = jax.nn.log_softmax(logits_i, axis=-1)
    lsm_t = jax.nn.log_softmax(logits_t, axis=-1)
    ce_i = -lsm_i[jnp.arange(n), labels]
    ce_t = -lsm_t[jnp.arange(n), labels]
    per_sample = ce_i + ce_t
    upper = int(n * 0.95)
    return jnp.mean(jnp.sort(per_sample)[:upper]) / 2.0


if __name__ == "__main__":
    N, D = 8, 32   # small batch / feature dim consistent with CLIP feature vectors
    key = jax.random.PRNGKey(0)
    k1, k2 = jax.random.split(key)
    image_features = jax.random.normal(k1, (N, D), dtype=jnp.float32)
    text_features = jax.random.normal(k2, (N, D), dtype=jnp.float32)
    # CLIP features are L2-normalized before the loss in practice.
    image_features = image_features / jnp.linalg.norm(image_features, axis=-1, keepdims=True)
    text_features = text_features / jnp.linalg.norm(text_features, axis=-1, keepdims=True)
    # logit_scale = exp(log(1/0.07)) = 1/0.07 (CLIP default)
    logit_scale = jnp.float32(1.0 / 0.07)

    ref = jax.block_until_ready(_reference_loss(image_features, text_features, logit_scale))

    # f32 path (matches the strict f32 reference).
    loss = jax.block_until_ready(clip_loss(image_features, text_features, logit_scale))
    assert jnp.allclose(loss, ref, rtol=1e-5, atol=1e-5), (loss, ref)

    # bf16 MXU path (production setting for large N): loose tolerance, since the
    # MXU-matmul diagonal vs. the f32 VPU diagonal differ by ~bf16 eps * |logit|.
    loss_bf16 = jax.block_until_ready(
        clip_loss(image_features, text_features, logit_scale, compute_dtype=jnp.bfloat16))
    assert bool(jnp.isfinite(loss_bf16)) and abs(float(loss_bf16) - float(ref)) < 0.3, (loss_bf16, ref)

    print("KERNEL_OK")
</pallas_src>

<mosaic_0001>
module attributes {stable_mosaic.version = 11 : i64} {
  func.func @_clip_per_sample_kernel(%arg0: i32, %arg1: i32, %arg2: memref<1xf32, #tpu.memory_space<smem>>, %arg3: memref<8x32xf32, #tpu.memory_space<vmem>>, %arg4: memref<8x32xf32, #tpu.memory_space<vmem>>, %arg5: memref<8x32xf32, #tpu.memory_space<vmem>>, %arg6: memref<8x32xf32, #tpu.memory_space<vmem>>, %arg7: memref<8x1xf32, #tpu.memory_space<vmem>>, %arg8: memref<8x1xf32, #tpu.memory_space<vmem>>, %arg9: memref<8x1xf32, #tpu.memory_space<vmem>>, %arg10: memref<8x1xf32, #tpu.memory_space<vmem>>, %arg11: memref<8x1xf32, #tpu.memory_space<vmem>>) attributes {dimension_semantics = [#tpu.dimension_semantics<parallel>, #tpu.dimension_semantics<arbitrary>], iteration_bounds = array<i64: 1, 1>, scalar_prefetch = 1 : i64, scratch_operands = 4 : i64, tpu.core_type = #tpu.core_type<tc>, window_params = [{transform_indices = @transform_0, window_bounds = array<i64: 8, 32>}, {transform_indices = @transform_1, window_bounds = array<i64: 8, 32>}, {transform_indices = @transform_2, window_bounds = array<i64: 8, 32>}, {transform_indices = @transform_3, window_bounds = array<i64: 8, 32>}, {transform_indices = @transform_4, window_bounds = array<i64: 8, 1>}]} {
    %c0_i32 = arith.constant 0 : i32
    %0 = arith.cmpi eq, %arg1, %c0_i32 : i32
    %1 = arith.extui %0 : i1 to i32
    %c0_i32_0 = arith.constant 0 : i32
    %2 = arith.cmpi ne, %1, %c0_i32_0 : i32
    scf.if %2 {
      %cst_32 = arith.constant 0xFF800000 : f32
      %49 = vector.broadcast %cst_32 : f32 to vector<8x1xf32>
      %c0_33 = arith.constant 0 : index
      %c0_34 = arith.constant 0 : index
      %50 = vector.load %arg8[%c0_33, %c0_34] : memref<8x1xf32, #tpu.memory_space<vmem>>, vector<8x1xf32>
      tpu.vector_store %arg8[%c0_33, %c0_34], %49 {strides = array<i32>} : memref<8x1xf32, #tpu.memory_space<vmem>>, vector<8x1xf32>,
      %cst_35 = arith.constant 0.000000e+00 : f32
      %51 = vector.broadcast %cst_35 : f32 to vector<8x1xf32>
      %c0_36 = arith.constant 0 : index
      %c0_37 = arith.constant 0 : index
      %52 = vector.load %arg9[%c0_36, %c0_37] : memref<8x1xf32, #tpu.memory_space<vmem>>, vector<8x1xf32>
      tpu.vector_store %arg9[%c0_36, %c0_37], %51 {strides = array<i32>} : memref<8x1xf32, #tpu.memory_space<vmem>>, vector<8x1xf32>,
      %cst_38 = arith.constant 0xFF800000 : f32
      %53 = vector.broadcast %cst_38 : f32 to vector<8x1xf32>
      %c0_39 = arith.constant 0 : index
      %c0_40 = arith.constant 0 : index
      %54 = vector.load %arg10[%c0_39, %c0_40] : memref<8x1xf32, #tpu.memory_space<vmem>>, vector<8x1xf32>
      tpu.vector_store %arg10[%c0_39, %c0_40], %53 {strides = array<i32>} : memref<8x1xf32, #tpu.memory_space<vmem>>, vector<8x1xf32>,
      %cst_41 = arith.constant 0.000000e+00 : f32
      %55 = vector.broadcast %cst_41 : f32 to vector<8x1xf32>
      %c0_42 = arith.constant 0 : index
      %c0_43 = arith.constant 0 : index
      %56 = vector.load %arg11[%c0_42, %c0_43] : memref<8x1xf32, #tpu.memory_space<vmem>>, vector<8x1xf32>
      tpu.vector_store %arg11[%c0_42, %c0_43], %55 {strides = array<i32>} : memref<8x1xf32, #tpu.memory_space<vmem>>, vector<8x1xf32>,
    } else {
    }
    %c0 = arith.constant 0 : index
    %3 = memref.load %arg2[%c0] : memref<1xf32, #tpu.memory_space<smem>>
    %c0_1 = arith.constant 0 : index
    %c0_2 = arith.constant 0 : index
    %4 = vector.load %arg3[%c0_1, %c0_2] : memref<8x32xf32, #tpu.memory_space<vmem>>, vector<8x32xf32>
    %c0_3 = arith.constant 0 : index
    %c0_4 = arith.constant 0 : index
    %5 = vector.load %arg5[%c0_3, %c0_4] : memref<8x32xf32, #tpu.memory_space<vmem>>, vector<8x32xf32>
    %cst = arith.constant dense<0.000000e+00> : vector<8x8xf32>
    %6 = tpu.matmul %4, %5, %cst {dimension_numbers = #tpu.dot_dimension_numbers<[1], [1], [0], [0], [0, 0, 1, 0], [], []>} : vector<8x32xf32>, vector<8x32xf32>, vector<8x8xf32> -> vector<8x8xf32>
    %7 = vector.broadcast %3 : f32 to vector<8x8xf32>
    %8 = arith.mulf %7, %6 : vector<8x8xf32>
    %c0_5 = arith.constant 0 : index
    %c0_6 = arith.constant 0 : index
    %9 = vector.load %arg8[%c0_5, %c0_6] : memref<8x1xf32, #tpu.memory_space<vmem>>, vector<8x1xf32>
    %cst_7 = arith.constant dense<0xFF800000> : vector<8xf32>
    %10 = vector.multi_reduction <maximumf>, %8, %cst_7 [1] : vector<8x8xf32> to vector<8xf32>
    %11 = vector.shape_cast %10 : vector<8xf32> to vector<8x1xf32>
    %12 = arith.maximumf %9, %11 : vector<8x1xf32>
    %13 = arith.subf %9, %12 : vector<8x1xf32>
    %14 = math.exp %13 : vector<8x1xf32>
    %c0_8 = arith.constant 0 : index
    %c0_9 = arith.constant 0 : index
    %15 = vector.load %arg9[%c0_8, %c0_9] : memref<8x1xf32, #tpu.memory_space<vmem>>, vector<8x1xf32>
    %16 = arith.mulf %14, %15 : vector<8x1xf32>
    %17 = vector.broadcast %12 : vector<8x1xf32> to vector<8x8xf32>
    %18 = arith.subf %8, %17 : vector<8x8xf32>
    %19 = math.exp %18 : vector<8x8xf32>
    %cst_10 = arith.constant dense<0.000000e+00> : vector<8xf32>
    %20 = vector.multi_reduction <add>, %19, %cst_10 [1] : vector<8x8xf32> to vector<8xf32>
    %21 = vector.shape_cast %20 : vector<8xf32> to vector<8x1xf32>
    %22 = arith.addf %16, %21 : vector<8x1xf32>
    %c0_11 = arith.constant 0 : index
    %c0_12 = arith.constant 0 : index
    %23 = vector.load %arg9[%c0_11, %c0_12] : memref<8x1xf32, #tpu.memory_space<vmem>>, vector<8x1xf32>
    tpu.vector_store %arg9[%c0_11, %c0_12], %22 {strides = array<i32>} : memref<8x1xf32, #tpu.memory_space<vmem>>, vector<8x1xf32>,
    %c0_13 = arith.constant 0 : index
    %c0_14 = arith.constant 0 : index
    %24 = vector.load %arg8[%c0_13, %c0_14] : memref<8x1xf32, #tpu.memory_space<vmem>>, vector<8x1xf32>
    tpu.vector_store %arg8[%c0_13, %c0_14], %12 {strides = array<i32>} : memref<8x1xf32, #tpu.memory_space<vmem>>, vector<8x1xf32>,
    %c0_15 = arith.constant 0 : index
    %c0_16 = arith.constant 0 : index
    %25 = vector.load %arg4[%c0_15, %c0_16] : memref<8x32xf32, #tpu.memory_space<vmem>>, vector<8x32xf32>
    %c0_17 = arith.constant 0 : index
    %c0_18 = arith.constant 0 : index
    %26 = vector.load %arg6[%c0_17, %c0_18] : memref<8x32xf32, #tpu.memory_space<vmem>>, vector<8x32xf32>
    %cst_19 = arith.constant dense<0.000000e+00> : vector<8x8xf32>
    %27 = tpu.matmul %25, %26, %cst_19 {dimension_numbers = #tpu.dot_dimension_numbers<[1], [1], [0], [0], [0, 0, 1, 0], [], []>} : vector<8x32xf32>, vector<8x32xf32>, vector<8x8xf32> -> vector<8x8xf32>
    %28 = vector.broadcast %3 : f32 to vector<8x8xf32>
    %29 = arith.mulf %28, %27 : vector<8x8xf32>
    %c0_20 = arith.constant 0 : index
    %c0_21 = arith.constant 0 : index
    %30 = vector.load %arg10[%c0_20, %c0_21] : memref<8x1xf32, #tpu.memory_space<vmem>>, vector<8x1xf32>
    %cst_22 = arith.constant dense<0xFF800000> : vector<8xf32>
    %31 = vector.multi_reduction <maximumf>, %29, %cst_22 [1] : vector<8x8xf32> to vector<8xf32>
    %32 = vector.shape_cast %31 : vector<8xf32> to vector<8x1xf32>
    %33 = arith.maximumf %30, %32 : vector<8x1xf32>
    %34 = arith.subf %30, %33 : vector<8x1xf32>
    %35 = math.exp %34 : vector<8x1xf32>
    %c0_23 = arith.constant 0 : index
    %c0_24 = arith.constant 0 : index
    %36 = vector.load %arg11[%c0_23, %c0_24] : memref<8x1xf32, #tpu.memory_space<vmem>>, vector<8x1xf32>
    %37 = arith.mulf %35, %36 : vector<8x1xf32>
    %38 = vector.broadcast %33 : vector<8x1xf32> to vector<8x8xf32>
    %39 = arith.subf %29, %38 : vector<8x8xf32>
    %40 = math.exp %39 : vector<8x8xf32>
    %cst_25 = arith.constant dense<0.000000e+00> : vector<8xf32>
    %41 = vector.multi_reduction <add>, %40, %cst_25 [1] : vector<8x8xf32> to vector<8xf32>
    %42 = vector.shape_cast %41 : vector<8xf32> to vector<8x1xf32>
    %43 = arith.addf %37, %42 : vector<8x1xf32>
    %c0_26 = arith.constant 0 : index
    %c0_27 = arith.constant 0 : index
    %44 = vector.load %arg11[%c0_26, %c0_27] : memref<8x1xf32, #tpu.memory_space<vmem>>, vector<8x1xf32>
    tpu.vector_store %arg11[%c0_26, %c0_27], %43 {strides = array<i32>} : memref<8x1xf32, #tpu.memory_space<vmem>>, vector<8x1xf32>,
    %c0_28 = arith.constant 0 : index
    %c0_29 = arith.constant 0 : index
    %45 = vector.load %arg10[%c0_28, %c0_29] : memref<8x1xf32, #tpu.memory_space<vmem>>, vector<8x1xf32>
    tpu.vector_store %arg10[%c0_28, %c0_29], %33 {strides = array<i32>} : memref<8x1xf32, #tpu.memory_space<vmem>>, vector<8x1xf32>,
    %c0_i32_30 = arith.constant 0 : i32
    %46 = arith.cmpi eq, %arg1, %c0_i32_30 : i32
    %47 = arith.extui %46 : i1 to i32
    %c0_i32_31 = arith.constant 0 : i32
    %48 = arith.cmpi ne, %47, %c0_i32_31 : i32
    scf.if %48 {
      %c0_32 = arith.constant 0 : index
      %c0_33 = arith.constant 0 : index
      %49 = vector.load %arg3[%c0_32, %c0_33] : memref<8x32xf32, #tpu.memory_space<vmem>>, vector<8x32xf32>
      %c0_34 = arith.constant 0 : index
      %c0_35 = arith.constant 0 : index
      %50 = vector.load %arg4[%c0_34, %c0_35] : memref<8x32xf32, #tpu.memory_space<vmem>>, vector<8x32xf32>
      %51 = arith.mulf %49, %50 : vector<8x32xf32>
      %cst_36 = arith.constant dense<0.000000e+00> : vector<8xf32>
      %52 = vector.multi_reduction <add>, %51, %cst_36 [1] : vector<8x32xf32> to vector<8xf32>
      %53 = vector.shape_cast %52 : vector<8xf32> to vector<8x1xf32>
      %54 = vector.broadcast %3 : f32 to vector<8x1xf32>
      %55 = arith.mulf %54, %53 : vector<8x1xf32>
      %c0_37 = arith.constant 0 : index
      %c0_38 = arith.constant 0 : index
      %56 = vector.load %arg8[%c0_37, %c0_38] : memref<8x1xf32, #tpu.memory_space<vmem>>, vector<8x1xf32>
      %c0_39 = arith.constant 0 : index
      %c0_40 = arith.constant 0 : index
      %57 = vector.load %arg9[%c0_39, %c0_40] : memref<8x1xf32, #tpu.memory_space<vmem>>, vector<8x1xf32>
      %58 = math.log %57 : vector<8x1xf32>
      %59 = arith.addf %56, %58 : vector<8x1xf32>
      %c0_41 = arith.constant 0 : index
      %c0_42 = arith.constant 0 : index
      %60 = vector.load %arg10[%c0_41, %c0_42] : memref<8x1xf32, #tpu.memory_space<vmem>>, vector<8x1xf32>
      %c0_43 = arith.constant 0 : index
      %c0_44 = arith.constant 0 : index
      %61 = vector.load %arg11[%c0_43, %c0_44] : memref<8x1xf32, #tpu.memory_space<vmem>>, vector<8x1xf32>
      %62 = math.log %61 : vector<8x1xf32>
      %63 = arith.addf %60, %62 : vector<8x1xf32>
      %64 = arith.addf %59, %63 : vector<8x1xf32>
      %cst_45 = arith.constant 2.000000e+00 : f32
      %65 = vector.broadcast %cst_45 : f32 to vector<8x1xf32>
      %66 = arith.mulf %65, %55 : vector<8x1xf32>
      %67 = arith.subf %64, %66 : vector<8x1xf32>
      %c0_46 = arith.constant 0 : index
      %c0_47 = arith.constant 0 : index
      %68 = vector.load %arg7[%c0_46, %c0_47] : memref<8x1xf32, #tpu.memory_space<vmem>>, vector<8x1xf32>
      tpu.vector_store %arg7[%c0_46, %c0_47], %67 {strides = array<i32>} : memref<8x1xf32, #tpu.memory_space<vmem>>, vector<8x1xf32>,
    } else {
    }
    return
  }
  func.func @transform_0(%arg0: i32, %arg1: i32, %arg2: memref<1xf32, #tpu.memory_space<smem>>) -> (i32, i32) {
    %c0_i32 = arith.constant 0 : i32
    %c0_i32_0 = arith.constant 0 : i32
    return %arg0, %c0_i32 : i32, i32
  }
  func.func @transform_1(%arg0: i32, %arg1: i32, %arg2: memref<1xf32, #tpu.memory_space<smem>>) -> (i32, i32) {
    %c0_i32 = arith.constant 0 : i32
    %c0_i32_0 = arith.constant 0 : i32
    return %arg0, %c0_i32 : i32, i32
  }
  func.func @transform_2(%arg0: i32, %arg1: i32, %arg2: memref<1xf32, #tpu.memory_space<smem>>) -> (i32, i32) {
    %c0_i32 = arith.constant 0 : i32
    %c0_i32_0 = arith.constant 0 : i32
    return %arg1, %c0_i32 : i32, i32
  }
  func.func @transform_3(%arg0: i32, %arg1: i32, %arg2: memref<1xf32, #tpu.memory_space<smem>>) -> (i32, i32) {
    %c0_i32 = arith.constant 0 : i32
    %c0_i32_0 = arith.constant 0 : i32
    return %arg1, %c0_i32 : i32, i32
  }
  func.func @transform_4(%arg0: i32, %arg1: i32, %arg2: memref<1xf32, #tpu.memory_space<smem>>) -> (i32, i32) {
    %c0_i32 = arith.constant 0 : i32
    %c0_i32_0 = arith.constant 0 : i32
    return %arg0, %c0_i32 : i32, i32
  }
}

</mosaic_0001>

<llo_original>
// kernel: tpu_custom_call.1
$region0: #{tpu_custom_call.1}
  #allocation0 [shape = 'u32[]', space=smem, size = 0x4, offset = 0x4, fixed_abs, tag = 'smem constant byte address 0x4 - core index']
  #allocation1 [shape = 'u32[144,128]{1,0:T(1,128)}', space=vmem, size = 0x12000, scoped, tag = 'internal scratch']
  #allocation2 [shape = 'f32[8,1]{1,0:T(8,128)}', space=vmem, size = 0x1000, scoped, tag = 'scratch operand']
  #allocation3 [shape = 'f32[8,1]{1,0:T(8,128)}', space=vmem, size = 0x1000, scoped, tag = 'scratch operand']
  #allocation4 [shape = 'f32[8,1]{1,0:T(8,128)}', space=vmem, size = 0x1000, scoped, tag = 'scratch operand']
  #allocation5 [shape = 'f32[8,1]{1,0:T(8,128)}', space=vmem, size = 0x1000, scoped, tag = 'scratch operand']
  #allocation6 [shape = 's32[1]{0}', space=sflag, size = 0x4, scoped, tag = 'scoped memory for tpu_custom_call.1']
  #allocation7 [shape = 'f32[1]{0:T(128)S(6)}', space=smem, size = 0x200, scoped, tag = 'prefetched SMEM operand 0']
  %s0 = inlined_call_operand.<no memory space> [shape: f32[1], index: 0, kind: input, shape index: {}]
  %s1 = inlined_call_operand.hbm [shape: f32[8,32], index: 1, kind: input, shape index: {}]
  %s2 = inlined_call_operand.hbm [shape: f32[8,32], index: 2, kind: input, shape index: {}]
  %s3 = inlined_call_operand.vmem [shape: f32[8,32], index: 3, kind: input, shape index: {}]
  %s4 = inlined_call_operand.hbm [shape: f32[8,32], index: 4, kind: input, shape index: {}]
  %s5 = inlined_call_operand.vmem [shape: f32[8,1], index: 5, kind: output, shape index: {}]
  %s6 = sld [smem:[#allocation0]]
  $region46: #{tpu_custom_call.1} parent=0
    _
  %s8 = ssub.s32 1, %s6
  %s9 = scalar_select 0, %s8, %s6
  %10 = sst [smem:[#allocation7]] %s0
  $region1: #{tpu_custom_call.1} parent=0
    #allocation8 [shape = 'u8[4096]{0}', space=vmem, size = 0x1000, scoped, tag = 'input window, operand 1, single buffered']
    #allocation9 [shape = 's32[1]{0}', space=sflag, size = 0x4, scoped, tag = 'scoped memory for tpu_custom_call.1']
    #allocation10 [shape = 'u8[4096]{0}', space=vmem, size = 0x1000, scoped, tag = 'input window, operand 2, single buffered']
    #allocation11 [shape = 's32[1]{0}', space=sflag, size = 0x4, scoped, tag = 'scoped memory for tpu_custom_call.1']
    #allocation12 [shape = 'u8[4096]{0}', space=vmem, size = 0x1000, scoped, tag = 'input window, operand 4, single buffered']
    %11 = vsyncpa [#allocation9], 0
    %12 = vsyncpa [#allocation11], 0
    // Predicated region
    $region2: #{tpu_custom_call.1} parent=1 // pred_check
      _
    $region3: #{tpu_custom_call.1} parent=1 // pred_check_branch
      %14 = sbr.rel (0) target = $region5
    $region4: #{tpu_custom_call.1} parent=1 // pred_region
      %s16 = ssub.s32 128, 128
      %17 = vsyncadd [#allocation9], %s16
      %s19 = sshll.u32 [#allocation8], 4
      %s20 = int_to_ptr.vmem [resolvable:$true] %s19
      %22 = dma.hbm_to_vmem [thread:$0]  %s1, 128, %s20, [#allocation9]
    $region5: #{tpu_custom_call.1} parent=1 // pred_fallthru
      _
    // Predicated region
    $region6: #{tpu_custom_call.1} parent=1 // pred_check
      _
    $region7: #{tpu_custom_call.1} parent=1 // pred_check_branch
      %24 = sbr.rel (0) target = $region9
    $region8: #{tpu_custom_call.1} parent=1 // pred_region
      %s26 = ssub.s32 128, 128
      %27 = vsyncadd [#allocation11], %s26
      %s29 = sshll.u32 [#allocation10], 4
      %s30 = int_to_ptr.vmem [resolvable:$true] %s29
      %32 = dma.hbm_to_vmem [thread:$0]  %s2, 128, %s30, [#allocation11]
    $region9: #{tpu_custom_call.1} parent=1 // pred_fallthru
      _
    // Predicated region
    $region10: #{tpu_custom_call.1} parent=1 // pred_check
      _
    $region11: #{tpu_custom_call.1} parent=1 // pred_check_branch
      %34 = sbr.rel (0) target = $region13
    $region12: #{tpu_custom_call.1} parent=1 // pred_region
      _
    $region13: #{tpu_custom_call.1} parent=1 // pred_fallthru
      _
    // Predicated region
    $region14: #{tpu_custom_call.1} parent=1 // pred_check
      _
    $region15: #{tpu_custom_call.1} parent=1 // pred_check_branch
      %36 = sbr.rel (0) target = $region17
    $region16: #{tpu_custom_call.1} parent=1 // pred_region
      %s38 = ssub.s32 128, 128
      %39 = vsyncadd [#allocation11], %s38
      %s41 = sshll.u32 [#allocation12], 4
      %s42 = int_to_ptr.vmem [resolvable:$true] %s41
      %44 = dma.hbm_to_vmem [thread:$0]  %s4, 128, %s42, [#allocation11]
    $region17: #{tpu_custom_call.1} parent=1 // pred_fallthru
      _
    // Predicated region
    $region18: #{tpu_custom_call.1} parent=1 // pred_check
      _
    $region19: #{tpu_custom_call.1} parent=1 // pred_check_branch
      %46 = sbr.rel (0) target = $region21
    $region20: #{tpu_custom_call.1} parent=1 // pred_region
      %47 = dma.done [#allocation9], 128
    $region21: #{tpu_custom_call.1} parent=1 // pred_fallthru
      _
    // Predicated region
    $region22: #{tpu_custom_call.1} parent=1 // pred_check
      _
    $region23: #{tpu_custom_call.1} parent=1 // pred_check_branch
      %49 = sbr.rel (0) target = $region25
    $region24: #{tpu_custom_call.1} parent=1 // pred_region
      %50 = dma.done [#allocation11], 128
    $region25: #{tpu_custom_call.1} parent=1 // pred_fallthru
      _
    // Predicated region
    $region26: #{tpu_custom_call.1} parent=1 // pred_check
      _
    $region27: #{tpu_custom_call.1} parent=1 // pred_check_branch
      %52 = sbr.rel (0) target = $region29
    $region28: #{tpu_custom_call.1} parent=1 // pred_region
      %53 = dma.done [#allocation11], 128
    $region29: #{tpu_custom_call.1} parent=1 // pred_fallthru
      _
    %p54 = scmp.eq.s32.totalorder 0, 0
    // Predicated region
    $region30: #{tpu_custom_call.1} parent=1 // pred_check
      %p55 = pneg %p54
    $region31: #{tpu_custom_call.1} parent=1 // pred_check_branch
      %57 = sbr.rel (%p55) target = $region33
    $region32: #{tpu_custom_call.1} parent=1 // pred_region
      %vm58 = vcmask 7168
      %59 = vst.msk [vmem:[#allocation2] sm:$0xff] %vm58, -inf
      %60 = vst.msk [vmem:[#allocation3] sm:$0xff] %vm58, 0.0
      %61 = vst.msk [vmem:[#allocation4] sm:$0xff] %vm58, -inf
      %62 = vst.msk [vmem:[#allocation5] sm:$0xff] %vm58, 0.0
    $region33: #{tpu_custom_call.1} parent=1 // pred_fallthru
      _
    %s63 = sld [smem:[#allocation7]]
    %v64 = vld [vmem:[#allocation8] sm:$0xff]
    %v65 = vld [vmem:[%s3] sm:$0xff]
    %vm66 = vcmask 261120
    %v68 = vsel %vm66, %v64, 0
    %v71 = vsel %vm66, %v65, 0
    %73 = vmatprep.subr.mxu0 0.0
    %74 = vmatpush1.xpose.msra.mxu0 %v71
    %75 = vmatprep.subr.mxu0 0.0
    %76 = vmatpush1.xpose.msra.mxu0 0.0
    %77 = vmatprep.subr.mxu0 0.0
    %78 = vmatpush1.xpose.msra.mxu0 0.0
    %79 = vmatprep.subr.mxu0 0.0
    %80 = vmatpush1.xpose.msra.mxu0 0.0
    %81 = vmatprep.subr.mxu0 0.0
    %82 = vmatpush1.xpose.msra.mxu0 0.0
    %83 = vmatprep.subr.mxu0 0.0
    %84 = vmatpush1.xpose.msra.mxu0 0.0
    %85 = vmatprep.subr.mxu0 0.0
    %86 = vmatpush1.xpose.msra.mxu0 0.0
    %87 = vmatprep.subr.mxu0 0.0
    %88 = vmatpush1.xpose.msra.mxu0 0.0
    %89 = vmatprep.subr.mxu0 0.0
    %90 = vmatpush1.xpose.msra.mxu0 0.0
    %91 = vmatprep.subr.mxu0 0.0
    %92 = vmatpush1.xpose.msra.mxu0 0.0
    %93 = vmatprep.subr.mxu0 0.0
    %94 = vmatpush1.xpose.msra.mxu0 0.0
    %95 = vmatprep.subr.mxu0 0.0
    %96 = vmatpush1.xpose.msra.mxu0 0.0
    %97 = vmatprep.subr.mxu0 0.0
    %98 = vmatpush1.xpose.msra.mxu0 0.0
    %99 = vmatprep.subr.mxu0 0.0
    %100 = vmatpush1.xpose.msra.mxu0 0.0
    %101 = vmatprep.subr.mxu0 0.0
    %102 = vmatpush1.xpose.msra.mxu0 0.0
    %103 = vmatprep.subr.mxu0 0.0
    %104 = vmatpush1.xpose.msra.mxu0 0.0
    %105 = vmatprep.subr.mxu0 0.0
    %106 = vmatpush1.xpose.msra.mxu0 0.0
    %107 = vmatprep.subr.mxu0 0.0
    %108 = vmatpush1.xpose.msra.mxu0 0.0
    %109 = vmatprep.subr.mxu0 0.0
    %110 = vmatpush1.xpose.msra.mxu0 0.0
    %111 = vmatprep.subr.mxu0 0.0
    %112 = vmatpush1.xpose.msra.mxu0 0.0
    %113 = vmatprep.subr.mxu0 0.0
    %114 = vmatpush1.xpose.msra.mxu0 0.0
    %115 = vmatprep.subr.mxu0 0.0
    %116 = vmatpush1.xpose.msra.mxu0 0.0
    %117 = vmatprep.subr.mxu0 0.0
    %118 = vmatpush1.xpose.msra.mxu0 0.0
    %119 = vmatprep.subr.mxu0 0.0
    %120 = vmatpush1.xpose.msra.mxu0 0.0
    %121 = vmatprep.subr.mxu0 0.0
    %122 = vmatpush1.xpose.msra.mxu0 0.0
    %123 = vmatprep.subr.mxu0 0.0
    %124 = vmatpush1.xpose.msra.mxu0 0.0
    %125 = vmatprep.subr.mxu0 0.0
    %126 = vmatpush1.xpose.msra.mxu0 0.0
    %127 = vmatprep.subr.mxu0 0.0
    %128 = vmatpush1.xpose.msra.mxu0 0.0
    %129 = vmatprep.subr.mxu0 0.0
    %130 = vmatpush1.xpose.msra.mxu0 0.0
    %131 = vmatprep.subr.mxu0 0.0
    %132 = vmatpush1.xpose.msra.mxu0 0.0
    %133 = vmatprep.subr.mxu0 0.0
    %134 = vmatpush1.xpose.msra.mxu0 0.0
    %135 = vmatprep.subr.mxu0 0.0
    %136 = vmatpush1.xpose.msra.mxu0 0.0
    %137 = vmatprep.mubr.f32.mxu0 0.0
    %138 = vmatmul.mubr.f32.gmra.mrb[0].mxu0 %v68
    %v139 = vpop.f32.mrb[0].mxu0
    %v140 = vadd.f32 0.0, %v139
    %v141 = vpop.f32.mrb[0].mxu0
    %142 = vdwg.mxu0
    %v143 = vstv %s63
    %v144 = vmul.f32 %v143, %v140
    %v145 = vld [vmem:[#allocation2] sm:$0xff]
    %vm146 = vcmask 64512
    %v147 = vsel %vm146, %v144, -inf
    %148 = vmax.xlane.f32.xlu0 %v147
    %v149 = vpop.xlane.xlu0 %148
    %v150 = vmax.f32 %v145, %v149
    %v151 = vsub.f32 %v145, %v150
    %v152 = vmul.f32 %v151, 1.442695
    %v153 = vpow.pop %v152
    %v154 = vld [vmem:[#allocation3] sm:$0xff]
    %v155 = vmul.f32 %v153, %v154
    %157 = vset.pattern.permute.xlu0 0
    %158 = vperm.xlu0 %157, %v150
    %v159 = vpop.permute.xlu0 %158
    %v161 = vsub.f32 %v144, %v159
    %v162 = vmul.f32 %v161, 1.442695
    %v163 = vpow.pop %v162
    %v164 = vsel %vm146, %v163, 0.0
    %165 = vadd.xlane.f32.xlu0 %v164
    %v166 = vpop.xlane.xlu0 %165
    %v167 = vadd.f32 %v155, %v166
    %vm168 = vcmask 7168
    %169 = vst.msk [vmem:[#allocation3] sm:$0xff] %vm168, %v167
    %170 = vst.msk [vmem:[#allocation2] sm:$0xff] %vm168, %v150
    %v171 = vld [vmem:[#allocation10] sm:$0xff]
    %v172 = vld [vmem:[#allocation12] sm:$0xff]
    %v174 = vsel %vm66, %v171, 0
    %v177 = vsel %vm66, %v172, 0
    %179 = vmatprep.subr.mxu0 0.0
    %180 = vmatpush1.xpose.msra.mxu0 %v177
    %181 = vmatprep.subr.mxu0 0.0
    %182 = vmatpush1.xpose.msra.mxu0 0.0
    %183 = vmatprep.subr.mxu0 0.0
    %184 = vmatpush1.xpose.msra.mxu0 0.0
    %185 = vmatprep.subr.mxu0 0.0
    %186 = vmatpush1.xpose.msra.mxu0 0.0
    %187 = vmatprep.subr.mxu0 0.0
    %188 = vmatpush1.xpose.msra.mxu0 0.0
    %189 = vmatprep.subr.mxu0 0.0
    %190 = vmatpush1.xpose.msra.mxu0 0.0
    %191 = vmatprep.subr.mxu0 0.0
    %192 = vmatpush1.xpose.msra.mxu0 0.0
    %193 = vmatprep.subr.mxu0 0.0
    %194 = vmatpush1.xpose.msra.mxu0 0.0
    %195 = vmatprep.subr.mxu0 0.0
    %196 = vmatpush1.xpose.msra.mxu0 0.0
    %197 = vmatprep.subr.mxu0 0.0
    %198 = vmatpush1.xpose.msra.mxu0 0.0
    %199 = vmatprep.subr.mxu0 0.0
    %200 = vmatpush1.xpose.msra.mxu0 0.0
    %201 = vmatprep.subr.mxu0 0.0
    %202 = vmatpush1.xpose.msra.mxu0 0.0
    %203 = vmatprep.subr.mxu0 0.0
    %204 = vmatpush1.xpose.msra.mxu0 0.0
    %205 = vmatprep.subr.mxu0 0.0
    %206 = vmatpush1.xpose.msra.mxu0 0.0
    %207 = vmatprep.subr.mxu0 0.0
    %208 = vmatpush1.xpose.msra.mxu0 0.0
    %209 = vmatprep.subr.mxu0 0.0
    %210 = vmatpush1.xpose.msra.mxu0 0.0
    %211 = vmatprep.subr.mxu0 0.0
    %212 = vmatpush1.xpose.msra.mxu0 0.0
    %213 = vmatprep.subr.mxu0 0.0
    %214 = vmatpush1.xpose.msra.mxu0 0.0
    %215 = vmatprep.subr.mxu0 0.0
    %216 = vmatpush1.xpose.msra.mxu0 0.0
    %217 = vmatprep.subr.mxu0 0.0
    %218 = vmatpush1.xpose.msra.mxu0 0.0
    %219 = vmatprep.subr.mxu0 0.0
    %220 = vmatpush1.xpose.msra.mxu0 0.0
    %221 = vmatprep.subr.mxu0 0.0
    %222 = vmatpush1.xpose.msra.mxu0 0.0
    %223 = vmatprep.subr.mxu0 0.0
    %224 = vmatpush1.xpose.msra.mxu0 0.0
    %225 = vmatprep.subr.mxu0 0.0
    %226 = vmatpush1.xpose.msra.mxu0 0.0
    %227 = vmatprep.subr.mxu0 0.0
    %228 = vmatpush1.xpose.msra.mxu0 0.0
    %229 = vmatprep.subr.mxu0 0.0
    %230 = vmatpush1.xpose.msra.mxu0 0.0
    %231 = vmatprep.subr.mxu0 0.0
    %232 = vmatpush1.xpose.msra.mxu0 0.0
    %233 = vmatprep.subr.mxu0 0.0
    %234 = vmatpush1.xpose.msra.mxu0 0.0
    %235 = vmatprep.subr.mxu0 0.0
    %236 = vmatpush1.xpose.msra.mxu0 0.0
    %237 = vmatprep.subr.mxu0 0.0
    %238 = vmatpush1.xpose.msra.mxu0 0.0
    %239 = vmatprep.subr.mxu0 0.0
    %240 = vmatpush1.xpose.msra.mxu0 0.0
    %241 = vmatprep.subr.mxu0 0.0
    %242 = vmatpush1.xpose.msra.mxu0 0.0
    %243 = vmatprep.mubr.f32.mxu0 0.0
    %244 = vmatmul.mubr.f32.gmra.mrb[0].mxu0 %v174
    %v245 = vpop.f32.mrb[0].mxu0
    %v246 = vadd.f32 0.0, %v245
    %v247 = vpop.f32.mrb[0].mxu0
    %248 = vdwg.mxu0
    %v249 = vmul.f32 %v143, %v246
    %v250 = vld [vmem:[#allocation4] sm:$0xff]
    %v251 = vsel %vm146, %v249, -inf
    %252 = vmax.xlane.f32.xlu0 %v251
    %v253 = vpop.xlane.xlu0 %252
    %v254 = vmax.f32 %v250, %v253
    %v255 = vsub.f32 %v250, %v254
    %v256 = vmul.f32 %v255, 1.442695
    %v257 = vpow.pop %v256
    %v258 = vld [vmem:[#allocation5] sm:$0xff]
    %v259 = vmul.f32 %v257, %v258
    %261 = vset.pattern.permute.xlu0 0
    %262 = vperm.xlu0 %261, %v254
    %v263 = vpop.permute.xlu0 %262
    %v265 = vsub.f32 %v249, %v263
    %v266 = vmul.f32 %v265, 1.442695
    %v267 = vpow.pop %v266
    %v268 = vsel %vm146, %v267, 0.0
    %269 = vadd.xlane.f32.xlu0 %v268
    %v270 = vpop.xlane.xlu0 %269
    %v271 = vadd.f32 %v259, %v270
    %272 = vst.msk [vmem:[#allocation5] sm:$0xff] %vm168, %v271
    %273 = vst.msk [vmem:[#allocation4] sm:$0xff] %vm168, %v254
    // Predicated region
    $region34: #{tpu_custom_call.1} parent=1 // pred_check
      %p274 = pneg %p54
    $region35: #{tpu_custom_call.1} parent=1 // pred_check_branch
      %276 = sbr.rel (%p274) target = $region37
    $region36: #{tpu_custom_call.1} parent=1 // pred_region
      %v277 = vld [vmem:[#allocation8] sm:$0xff]
      %v278 = vld [vmem:[#allocation10] sm:$0xff]
      %v279 = vmul.f32 %v277, %v278
      %v280 = vsel %vm66, %v279, 0.0
      %281 = vadd.xlane.f32.xlu0 %v280
      %v282 = vpop.xlane.xlu0 %281
      %v283 = vmul.f32 %v143, %v282
      %v284 = vld [vmem:[#allocation2] sm:$0xff]
      %v285 = vld [vmem:[#allocation3] sm:$0xff]
      %v286 = vlog2.pop %v285
      %v287 = vmul.f32 %v286, 0.6931472
      %v288 = vadd.f32 %v284, %v287
      %v289 = vld [vmem:[#allocation4] sm:$0xff]
      %v290 = vld [vmem:[#allocation5] sm:$0xff]
      %v291 = vlog2.pop %v290
      %v292 = vmul.f32 %v291, 0.6931472
      %v293 = vadd.f32 %v289, %v292
      %v294 = vadd.f32 %v288, %v293
      %v295 = vmul.f32 %v283, 2.0
      %v296 = vsub.f32 %v294, %v295
      %297 = vst.msk [vmem:[%s5] sm:$0xff] %vm168, %v296
    $region37: #{tpu_custom_call.1} parent=1 // pred_fallthru
      _
    // Predicated region
    $region38: #{tpu_custom_call.1} parent=1 // pred_check
      _
    $region39: #{tpu_custom_call.1} parent=1 // pred_check_branch
      %299 = sbr.rel (0) target = $region41
    $region40: #{tpu_custom_call.1} parent=1 // pred_region
      _
    $region41: #{tpu_custom_call.1} parent=1 // pred_fallthru
      _
    // Predicated region
    $region42: #{tpu_custom_call.1} parent=1 // pred_check
      _
    $region43: #{tpu_custom_call.1} parent=1 // pred_check_branch
      %301 = sbr.rel (0) target = $region45
    $region44: #{tpu_custom_call.1} parent=1 // pred_region
      _
    $region45: #{tpu_custom_call.1} parent=1 // pred_fallthru
      _
    %302 = vsyncpa [#allocation9], 1
    %303 = vsyncpa [#allocation11], 1

</llo_original>
